<compile_context>
chip_gen: v5e
topology: v5e:2x2
jax: 0.10.0
libtpu: 0.0.40
codegen_flags: <defaults>
</compile_context>

<pallas_src>
import functools
import math

import jax
import jax.numpy as jnp
from jax.experimental import pallas as pl
from jax.experimental.pallas import tpu as pltpu


_RES_DILATIONS = (1, 3, 9)
_HALO = sum(_RES_DILATIONS)          # receptive-field halo of the three ResUnits (=13)


def _round_up(x, m):
    return ((x + m - 1) // m) * m


# --------------------------------- fused kernel ---------------------------------

def _decoder_block_kernel(
    xw_ref,                                   # (1, 1, C_in, W_pad) bf16 halo'd window (auto-pipelined)
    wt_ref, bt_ref,                           # folded ConvTranspose: (C_out, 2S*C_in) bf16, (C_out,1) f32
    w1_ref, b1_ref,                           # fused ResUnit 1 (d=1): (C_out, 3*C_out) bf16, (C_out,1) f32
    w2_ref, b2_ref,                           # fused ResUnit 2 (d=3)
    w3_ref, b3_ref,                           # fused ResUnit 3 (d=9)
    o_ref,                                    # (1, C_out, T_up)
    *, S, T_up, T_hp, L_up,
):
    K_t = 2 * S
    H = _HALO
    t = pl.program_id(1)

    x = xw_ref[0, 0]                          # (C_in, W_pad) bf16, already resident in VMEM

    # Global upsampled positions covered by the lane-padded working buffer; positions outside
    # the real sequence must read as zero for the dilated convs (PyTorch zero padding).
    pos = (t * T_up - H) + jax.lax.broadcasted_iota(jnp.int32, (1, T_hp), 1)
    valid = jnp.logical_and(pos >= 0, pos < L_up)

    def taps(v, K, dil):
        # Stack the K tap slices along sublanes -> one larger-contraction MXU matmul.
        if K == 1:
            return v[:, :T_hp]
        return jnp.concatenate(
            [v[:, k * dil:k * dil + T_hp] for k in range(K)], axis=0)

    def conv(v, w_ref, b_ref, K, dil, mask):
        y = jnp.dot(w_ref[...], taps(v, K, dil),
                    preferred_element_type=jnp.float32) + b_ref[...]
        return jnp.where(mask, y, 0.0) if mask is not None else y

    # --- ConvTranspose1d == stride-1 conv over the zero-dilated, pre-padded window.
    h = conv(x, wt_ref, bt_ref, K_t, 1, valid)                    # (C_out, T_hp) f32

    def fused_res_unit(v, w_ref, b_ref, d, mask):
        # conv2 (k=1) was folded into conv1 (k=3, dilation d) in the wrapper -> one matmul.
        z = jnp.zeros((v.shape[0], d), jnp.bfloat16)
        vp = jnp.concatenate([z, v.astype(jnp.bfloat16), z], axis=1)
        return conv(vp, w_ref, b_ref, 3, d, mask)

    r = fused_res_unit(h, w1_ref, b1_ref, _RES_DILATIONS[0], valid)
    r = fused_res_unit(r, w2_ref, b2_ref, _RES_DILATIONS[1], valid)
    # No mask after the last unit: out-of-range columns never reach HBM (the central slice
    # below excludes the halo and Pallas clips the ragged last output block).
    r = fused_res_unit(r, w3_ref, b3_ref, _RES_DILATIONS[2], None)

    # Only the central T_up columns of the halo'd buffer are exact -> write those.
    o_ref[0] = r[:, H:H + T_up].astype(o_ref.dtype)


# ------------------------------- weight folding -------------------------------

def _fold_conv_weight(w):
    # (C_out, C_in, K) -> (C_out, K*C_in), k-major / ci-minor, matching the sublane-stacked
    # tap operand built in the kernel.
    c_out, c_in, k = w.shape
    return jnp.transpose(w, (0, 2, 1)).reshape(c_out, k * c_in)


def _fold_convT_weight(wt):
    # torch ConvTranspose1d weight (C_in, C_out, K) -> equivalent stride-1 Conv1d weight over
    # the zero-dilated input: w_eq[o, i, k] = wt[i, o, K-1-k].
    w_eq = jnp.flip(jnp.transpose(wt, (1, 0, 2)), axis=-1)
    return _fold_conv_weight(w_eq)


def _fuse_res_unit_weights(w1, b1, w2, b2):
    # No nonlinearity between conv1 and conv2 in this module, so the pointwise conv folds
    # exactly: W_eff[:, :, k] = W2 @ W1[:, :, k],  b_eff = W2 @ b1 + b2.
    w2m = w2[:, :, 0]
    w_eff = jnp.einsum("om,mck->ock", w2m, w1)
    b_eff = w2m @ b1 + b2
    return w_eff, b_eff


# ------------------------------- VMEM budgeting -------------------------------

def _vmem_capacity_bytes():
    try:
        info = pltpu.get_tpu_info()
        for attr in ("vmem_capacity_bytes", "vmem_bytes", "vmem_size_bytes"):
            v = getattr(info, attr, None)
            if v:
                return int(v)
    except Exception:
        pass
    return 64 * 1024 * 1024            # conservative (v7x-sized) fallback


def _vmem_bytes_estimate(C_in, C_out, K_t, T_up, out_bytes):
    T_hp = _round_up(T_up + 2 * _HALO, 128)
    W_pad = _round_up(T_hp + K_t - 1, 128)
    w_b = (C_out * K_t * C_in + 3 * (C_out * 3 * C_out)) * 2 + 4 * C_out * 4
    return (2 * C_in * W_pad * 2                     # double-buffered bf16 input window
            + 2 * C_out * T_up * out_bytes           # double-buffered output tile
            + 2 * w_b                                # resident weights (worst case x2)
            + (K_t * C_in + 3 * C_out) * T_hp * 2    # live bf16 tap stacks
            + 4 * C_out * T_hp * 4)                  # live f32 intermediates


# ------------------------------- wrapper -------------------------------

def decoder_block_pallas(params, x, S, *, tile_l=2048, out_dtype=None):
    """DecoderBlock forward. x: (B, C_in, L) -> (B, C_out, (L-1)*S - 2*(S//2) + 2S)."""
    B, C_in, L_in = x.shape
    wt, bt = params["conv_t"]
    C_out = wt.shape[1]
    K_t = 2 * S
    P = S // 2
    L_up = (L_in - 1) * S - 2 * P + K_t
    H = _HALO
    out_dtype = x.dtype if out_dtype is None else out_dtype
    out_bytes = jnp.dtype(out_dtype).itemsize

    # --- Pick a lane-dense L tile under a per-chip VMEM budget (v7x has only 64 MiB).
    vmem_cap = _vmem_capacity_bytes()
    budget = int(0.5 * vmem_cap)
    tile = max(128, (tile_l // 128) * 128)
    if L_up <= tile:
        T_up = L_up
    else:
        T_up = tile
        while T_up > 128 and _vmem_bytes_estimate(C_in, C_out, K_t, T_up, out_bytes) > budget:
            T_up -= 128
    NT = pl.cdiv(L_up, T_up)
    T_hp = _round_up(T_up + 2 * H, 128)              # lane-dense in-kernel working width
    W_pad = _round_up(T_hp + K_t - 1, 128)           # lane-dense halo'd input window

    # --- Zero-dilate (stride-S upsample) + pad the input once, in bf16, so the transposed
    # conv becomes a plain stride-1 conv with contiguous in-kernel slices.
    lpad = (K_t - 1 - P) + H
    L_x = (NT - 1) * T_up + W_pad
    xd = jnp.zeros((B, C_in, L_x), jnp.bfloat16)
    xd = xd.at[:, :, lpad:lpad + (L_in - 1) * S + 1:S].set(x.astype(jnp.bfloat16))

    # --- Pre-materialize the overlapping halo'd windows as (B, NT, C_in, W_pad) so the
    # standard BlockSpec pipeline double-buffers the per-tile fetch (replaces the previous
    # synchronous manual DMA; modest (W_pad/T_up - 1) duplication, in bf16).
    col = (jnp.arange(NT, dtype=jnp.int32) * T_up)[:, None] \
        + jnp.arange(W_pad, dtype=jnp.int32)[None, :]
    xw = jnp.transpose(jnp.take(xd, col, axis=2), (0, 2, 1, 3))    # (B, NT, C_in, W_pad)

    # --- Fold weights: ConvT -> (C_out, 2S*C_in); each ResUnit's pointwise conv2 folded into
    # its dilated conv1 -> (C_out, 3*C_out). Weights bf16, biases f32 columns.
    wt_f = _fold_convT_weight(wt).astype(jnp.bfloat16)
    bt_f = bt.reshape(-1, 1).astype(jnp.float32)

    def fused(name):
        w1, b1 = params[name + "_conv1"]
        w2, b2 = params[name + "_conv2"]
        w_eff, b_eff = _fuse_res_unit_weights(w1, b1, w2, b2)
        return (_fold_conv_weight(w_eff).astype(jnp.bfloat16),
                b_eff.reshape(-1, 1).astype(jnp.float32))

    w1e, b1e = fused("re1")
    w2e, b2e = fused("re2")
    w3e, b3e = fused("re3")

    operands = (xw, wt_f, bt_f, w1e, b1e, w2e, b2e, w3e, b3e)

    def resident_spec(a):
        return pl.BlockSpec(a.shape, lambda b, t: (0,) * a.ndim)

    in_specs = [pl.BlockSpec((1, 1, C_in, W_pad), lambda b, t: (b, t, 0, 0))]
    in_specs += [resident_spec(a) for a in operands[1:]]            # weights/biases resident

    kernel = functools.partial(_decoder_block_kernel,
                               S=S, T_up=T_up, T_hp=T_hp, L_up=L_up)

    return pl.pallas_call(
        kernel,
        out_shape=jax.ShapeDtypeStruct((B, C_out, L_up), out_dtype),
        grid_spec=pltpu.PrefetchScalarGridSpec(
            num_scalar_prefetch=0,
            grid=(B, NT),
            in_specs=in_specs,
            out_specs=pl.BlockSpec((1, C_out, T_up), lambda b, t: (b, 0, t)),
        ),
        compiler_params=pltpu.CompilerParams(
            # Both axes independent -> shardable across v7x's two TensorCores.
            dimension_semantics=("parallel", "parallel"),
            # ~75% of physical VMEM: ~96 MiB on v5e/v6e, ~48 MiB on v7x.
            vmem_limit_bytes=int(0.75 * vmem_cap),
        ),
    )(*operands)


# ------------------------------ parameter init (glue) ------------------------------

def _conv_init(key, c_in, c_out, k):
    kw, kb = jax.random.split(key)
    bound = 1.0 / math.sqrt(c_in * k)
    w = jax.random.uniform(kw, (c_out, c_in, k), jnp.float32, -bound, bound)
    b = jax.random.uniform(kb, (c_out,), jnp.float32, -bound, bound)
    return w, b


def _convT_init(key, c_in, c_out, k):
    kw, kb = jax.random.split(key)
    bound = 1.0 / math.sqrt(c_out * k)
    w = jax.random.uniform(kw, (c_in, c_out, k), jnp.float32, -bound, bound)
    b = jax.random.uniform(kb, (c_out,), jnp.float32, -bound, bound)
    return w, b


def init_decoder_block(key, input_channel, output_channel, S):
    keys = jax.random.split(key, 7)
    return {
        "conv_t":    _convT_init(keys[0], input_channel, output_channel, 2 * S),
        "re1_conv1": _conv_init(keys[1], output_channel, output_channel, 3),
        "re1_conv2": _conv_init(keys[2], output_channel, output_channel, 1),
        "re2_conv1": _conv_init(keys[3], output_channel, output_channel, 3),
        "re2_conv2": _conv_init(keys[4], output_channel, output_channel, 1),
        "re3_conv1": _conv_init(keys[5], output_channel, output_channel, 3),
        "re3_conv2": _conv_init(keys[6], output_channel, output_channel, 1),
    }


# ------------------------------ pure-JAX reference ------------------------------

def _conv1d_ref(x, w, b, *, dilation=1, padding=0):
    y = jax.lax.conv_general_dilated(
        x, w, window_strides=(1,), padding=[(padding, padding)],
        rhs_dilation=(dilation,), dimension_numbers=("NCH", "OIH", "NCH"),
        precision=jax.lax.Precision.HIGHEST)
    return y + b.reshape(1, -1, 1)


def _conv_transpose1d_ref(x, wt, b, S, P):
    # Direct PyTorch ConvTranspose1d definition: out[j] += x[i] * w[k] at j = i*S + k - P.
    B, C_in, L_in = x.shape
    C_out, K = wt.shape[1], wt.shape[2]
    L_up = (L_in - 1) * S - 2 * P + K
    prod = jnp.einsum("bil,iok->bokl", x, wt, precision=jax.lax.Precision.HIGHEST)
    full = jnp.zeros((B, C_out, (L_in - 1) * S + K), jnp.float32)
    for k in range(K):
        full = full.at[:, :, k:k + (L_in - 1) * S + 1:S].add(prod[:, :, k, :])
    full = full + b.reshape(1, -1, 1)
    return full[:, :, P:P + L_up]


def decoder_block_ref(params, x, S):
    wt, bt = params["conv_t"]
    x = _conv_transpose1d_ref(x, wt, bt, S, S // 2)
    for name, d in zip(("re1", "re2", "re3"), _RES_DILATIONS):
        w1, b1 = params[name + "_conv1"]
        w2, b2 = params[name + "_conv2"]
        x = _conv1d_ref(x, w1, b1, dilation=d, padding=d)
        x = _conv1d_ref(x, w2, b2)
    return x


# ----------------------------------------- main -----------------------------------------

if __name__ == "__main__":
    key = jax.random.PRNGKey(0)
    k_params, k_p3, k_x1, k_x2, k_x3 = jax.random.split(key, 5)

    # Case 1: tiny sequence (single L-tile path).
    B, C_in, C_out, S = 2, 4, 8, 2
    params = init_decoder_block(k_params, C_in, C_out, S)
    L1 = 16
    x1 = jax.random.normal(k_x1, (B, C_in, L1), jnp.float32)
    y1 = jax.block_until_ready(decoder_block_pallas(params, x1, S))
    L_up1 = (L1 - 1) * S - 2 * (S // 2) + 2 * S
    assert y1.shape == (B, C_out, L_up1), y1.shape
    y1_ref = decoder_block_ref(params, x1, S)
    err1 = float(jnp.max(jnp.abs(y1 - y1_ref)))
    assert jnp.allclose(y1, y1_ref, atol=5e-2, rtol=5e-2), err1    # bf16 MXU vs f32 reference

    # Case 2: longer sequence -> 4 L-tiles incl. a ragged last tile (halo + masking + clip).
    L2 = 200
    x2 = jax.random.normal(k_x2, (B, C_in, L2), jnp.float32)
    y2 = jax.block_until_ready(decoder_block_pallas(params, x2, S, tile_l=128))
    L_up2 = (L2 - 1) * S - 2 * (S // 2) + 2 * S
    assert y2.shape == (B, C_out, L_up2), y2.shape
    y2_ref = decoder_block_ref(params, x2, S)
    err2 = float(jnp.max(jnp.abs(y2 - y2_ref)))
    assert jnp.allclose(y2, y2_ref, atol=5e-2, rtol=5e-2), err2

    # Case 3: larger stride S=4 (wider transposed-conv kernel, asymmetric equivalent padding).
    B3, C_in3, C_out3, S3 = 1, 4, 8, 4
    params3 = init_decoder_block(k_p3, C_in3, C_out3, S3)
    L3 = 50
    x3 = jax.random.normal(k_x3, (B3, C_in3, L3), jnp.float32)
    y3 = jax.block_until_ready(decoder_block_pallas(params3, x3, S3, tile_l=128))
    L_up3 = (L3 - 1) * S3 - 2 * (S3 // 2) + 2 * S3
    assert y3.shape == (B3, C_out3, L_up3), y3.shape
    y3_ref = decoder_block_ref(params3, x3, S3)
    err3 = float(jnp.max(jnp.abs(y3 - y3_ref)))
    assert jnp.allclose(y3, y3_ref, atol=5e-2, rtol=5e-2), err3

    print("KERNEL_OK")
</pallas_src>

<mosaic_0001>
module attributes {stable_mosaic.version = 11 : i64} {
  func.func @_decoder_block_kernel(%arg0: i32, %arg1: i32, %arg2: memref<1x1x4x256xbf16, #tpu.memory_space<vmem>>, %arg3: memref<8x16xbf16, #tpu.memory_space<vmem>>, %arg4: memref<8x1xf32, #tpu.memory_space<vmem>>, %arg5: memref<8x24xbf16, #tpu.memory_space<vmem>>, %arg6: memref<8x1xf32, #tpu.memory_space<vmem>>, %arg7: memref<8x24xbf16, #tpu.memory_space<vmem>>, %arg8: memref<8x1xf32, #tpu.memory_space<vmem>>, %arg9: memref<8x24xbf16, #tpu.memory_space<vmem>>, %arg10: memref<8x1xf32, #tpu.memory_space<vmem>>, %arg11: memref<1x8x32xf32, #tpu.memory_space<vmem>>) attributes {dimension_semantics = [#tpu.dimension_semantics<parallel>, #tpu.dimension_semantics<parallel>], iteration_bounds = array<i64: 2, 1>, scalar_prefetch = 0 : i64, scratch_operands = 0 : i64, tpu.core_type = #tpu.core_type<tc>, window_params = [{transform_indices = @transform_0, window_bounds = array<i64: 1, 1, 4, 256>}, {pipeline_mode = #tpu.pipeline_mode<synchronous>, transform_indices = @transform_1, window_bounds = array<i64: 8, 16>}, {pipeline_mode = #tpu.pipeline_mode<synchronous>, transform_indices = @transform_2, window_bounds = array<i64: 8, 1>}, {pipeline_mode = #tpu.pipeline_mode<synchronous>, transform_indices = @transform_3, window_bounds = array<i64: 8, 24>}, {pipeline_mode = #tpu.pipeline_mode<synchronous>, transform_indices = @transform_4, window_bounds = array<i64: 8, 1>}, {pipeline_mode = #tpu.pipeline_mode<synchronous>, transform_indices = @transform_5, window_bounds = array<i64: 8, 24>}, {pipeline_mode = #tpu.pipeline_mode<synchronous>, transform_indices = @transform_6, window_bounds = array<i64: 8, 1>}, {pipeline_mode = #tpu.pipeline_mode<synchronous>, transform_indices = @transform_7, window_bounds = array<i64: 8, 24>}, {pipeline_mode = #tpu.pipeline_mode<synchronous>, transform_indices = @transform_8, window_bounds = array<i64: 8, 1>}, {transform_indices = @transform_9, window_bounds = array<i64: 1, 8, 32>}]} {
    %c0 = arith.constant 0 : index
    %c0_0 = arith.constant 0 : index
    %c0_1 = arith.constant 0 : index
    %c0_2 = arith.constant 0 : index
    %0 = vector.load %arg2[%c0, %c0_0, %c0_1, %c0_2] : memref<1x1x4x256xbf16, #tpu.memory_space<vmem>>, vector<1x1x4x256xbf16>
    %1 = vector.shape_cast %0 : vector<1x1x4x256xbf16> to vector<4x256xbf16>
    %c32_i32 = arith.constant 32 : i32
    %2 = arith.muli %arg1, %c32_i32 : i32
    %c13_i32 = arith.constant 13 : i32
    %3 = arith.subi %2, %c13_i32 : i32
    %4 = tpu.iota {dimensions = array<i32: 1>} : vector<1x128xi32>
    %5 = vector.broadcast %3 : i32 to vector<1x128xi32>
    %6 = arith.addi %5, %4 : vector<1x128xi32>
    %c0_i32 = arith.constant 0 : i32
    %7 = vector.broadcast %c0_i32 : i32 to vector<1x128xi32>
    %8 = arith.cmpi sge, %6, %7 : vector<1x128xi32>
    %c32_i32_3 = arith.constant 32 : i32
    %9 = vector.broadcast %c32_i32_3 : i32 to vector<1x128xi32>
    %10 = arith.cmpi slt, %6, %9 : vector<1x128xi32>
    %11 = arith.andi %8, %10 : vector<1x128xi1>
    %c0_4 = arith.constant 0 : index
    %c0_5 = arith.constant 0 : index
    %12 = vector.load %arg3[%c0_4, %c0_5] : memref<8x16xbf16, #tpu.memory_space<vmem>>, vector<8x16xbf16>
    %13 = vector.extract_strided_slice %1 {offsets = [0, 0], sizes = [4, 128], strides = [1, 1]} : vector<4x256xbf16> to vector<4x128xbf16>
    %14 = vector.extract_strided_slice %1 {offsets = [0, 1], sizes = [4, 128], strides = [1, 1]} : vector<4x256xbf16> to vector<4x128xbf16>
    %15 = vector.extract_strided_slice %1 {offsets = [0, 2], sizes = [4, 128], strides = [1, 1]} : vector<4x256xbf16> to vector<4x128xbf16>
    %16 = vector.extract_strided_slice %1 {offsets = [0, 3], sizes = [4, 128], strides = [1, 1]} : vector<4x256xbf16> to vector<4x128xbf16>
    %17 = tpu.concatenate %13, %14, %15, %16 in 0 : vector<4x128xbf16>, vector<4x128xbf16>, vector<4x128xbf16>, vector<4x128xbf16> -> vector<16x128xbf16>
    %cst = arith.constant dense<0.000000e+00> : vector<8x128xf32>
    %18 = tpu.matmul %12, %17, %cst {dimension_numbers = #tpu.dot_dimension_numbers<[1], [0], [0], [1], [0, 0, 1, 1], [], []>} : vector<8x16xbf16>, vector<16x128xbf16>, vector<8x128xf32> -> vector<8x128xf32>
    %c0_6 = arith.constant 0 : index
    %c0_7 = arith.constant 0 : index
    %19 = vector.load %arg4[%c0_6, %c0_7] : memref<8x1xf32, #tpu.memory_space<vmem>>, vector<8x1xf32>
    %20 = vector.broadcast %19 : vector<8x1xf32> to vector<8x128xf32>
    %21 = arith.addf %18, %20 : vector<8x128xf32>
    %cst_8 = arith.constant 0.000000e+00 : f32
    %22 = vector.shape_cast %11 : vector<1x128xi1> to vector<1x128xi1>
    %23 = vector.broadcast %22 : vector<1x128xi1> to vector<8x128xi1>
    %24 = vector.broadcast %cst_8 : f32 to vector<8x128xf32>
    %25 = arith.select %23, %21, %24 : vector<8x128xi1>, vector<8x128xf32>
    %cst_9 = arith.constant 0.000000e+00 : bf16
    %26 = vector.broadcast %cst_9 : bf16 to vector<8x1xbf16>
    %27 = arith.truncf %25 : vector<8x128xf32> to vector<8x128xbf16>
    %28 = tpu.concatenate %26, %27, %26 in 1 : vector<8x1xbf16>, vector<8x128xbf16>, vector<8x1xbf16> -> vector<8x130xbf16>
    %c0_10 = arith.constant 0 : index
    %c0_11 = arith.constant 0 : index
    %29 = vector.load %arg5[%c0_10, %c0_11] : memref<8x24xbf16, #tpu.memory_space<vmem>>, vector<8x24xbf16>
    %30 = vector.extract_strided_slice %28 {offsets = [0, 0], sizes = [8, 128], strides = [1, 1]} : vector<8x130xbf16> to vector<8x128xbf16>
    %31 = vector.extract_strided_slice %28 {offsets = [0, 1], sizes = [8, 128], strides = [1, 1]} : vector<8x130xbf16> to vector<8x128xbf16>
    %32 = vector.extract_strided_slice %28 {offsets = [0, 2], sizes = [8, 128], strides = [1, 1]} : vector<8x130xbf16> to vector<8x128xbf16>
    %33 = tpu.concatenate %30, %31, %32 in 0 : vector<8x128xbf16>, vector<8x128xbf16>, vector<8x128xbf16> -> vector<24x128xbf16>
    %cst_12 = arith.constant dense<0.000000e+00> : vector<8x128xf32>
    %34 = tpu.matmul %29, %33, %cst_12 {dimension_numbers = #tpu.dot_dimension_numbers<[1], [0], [0], [1], [0, 0, 1, 1], [], []>} : vector<8x24xbf16>, vector<24x128xbf16>, vector<8x128xf32> -> vector<8x128xf32>
    %c0_13 = arith.constant 0 : index
    %c0_14 = arith.constant 0 : index
    %35 = vector.load %arg6[%c0_13, %c0_14] : memref<8x1xf32, #tpu.memory_space<vmem>>, vector<8x1xf32>
    %36 = vector.broadcast %35 : vector<8x1xf32> to vector<8x128xf32>
    %37 = arith.addf %34, %36 : vector<8x128xf32>
    %cst_15 = arith.constant 0.000000e+00 : f32
    %38 = vector.shape_cast %11 : vector<1x128xi1> to vector<1x128xi1>
    %39 = vector.broadcast %38 : vector<1x128xi1> to vector<8x128xi1>
    %40 = vector.broadcast %cst_15 : f32 to vector<8x128xf32>
    %41 = arith.select %39, %37, %40 : vector<8x128xi1>, vector<8x128xf32>
    %cst_16 = arith.constant 0.000000e+00 : bf16
    %42 = vector.broadcast %cst_16 : bf16 to vector<8x3xbf16>
    %43 = arith.truncf %41 : vector<8x128xf32> to vector<8x128xbf16>
    %44 = tpu.concatenate %42, %43, %42 in 1 : vector<8x3xbf16>, vector<8x128xbf16>, vector<8x3xbf16> -> vector<8x134xbf16>
    %c0_17 = arith.constant 0 : index
    %c0_18 = arith.constant 0 : index
    %45 = vector.load %arg7[%c0_17, %c0_18] : memref<8x24xbf16, #tpu.memory_space<vmem>>, vector<8x24xbf16>
    %46 = vector.extract_strided_slice %44 {offsets = [0, 0], sizes = [8, 128], strides = [1, 1]} : vector<8x134xbf16> to vector<8x128xbf16>
    %47 = vector.extract_strided_slice %44 {offsets = [0, 3], sizes = [8, 128], strides = [1, 1]} : vector<8x134xbf16> to vector<8x128xbf16>
    %48 = vector.extract_strided_slice %44 {offsets = [0, 6], sizes = [8, 128], strides = [1, 1]} : vector<8x134xbf16> to vector<8x128xbf16>
    %49 = tpu.concatenate %46, %47, %48 in 0 : vector<8x128xbf16>, vector<8x128xbf16>, vector<8x128xbf16> -> vector<24x128xbf16>
    %cst_19 = arith.constant dense<0.000000e+00> : vector<8x128xf32>
    %50 = tpu.matmul %45, %49, %cst_19 {dimension_numbers = #tpu.dot_dimension_numbers<[1], [0], [0], [1], [0, 0, 1, 1], [], []>} : vector<8x24xbf16>, vector<24x128xbf16>, vector<8x128xf32> -> vector<8x128xf32>
    %c0_20 = arith.constant 0 : index
    %c0_21 = arith.constant 0 : index
    %51 = vector.load %arg8[%c0_20, %c0_21] : memref<8x1xf32, #tpu.memory_space<vmem>>, vector<8x1xf32>
    %52 = vector.broadcast %51 : vector<8x1xf32> to vector<8x128xf32>
    %53 = arith.addf %50, %52 : vector<8x128xf32>
    %cst_22 = arith.constant 0.000000e+00 : f32
    %54 = vector.shape_cast %11 : vector<1x128xi1> to vector<1x128xi1>
    %55 = vector.broadcast %54 : vector<1x128xi1> to vector<8x128xi1>
    %56 = vector.broadcast %cst_22 : f32 to vector<8x128xf32>
    %57 = arith.select %55, %53, %56 : vector<8x128xi1>, vector<8x128xf32>
    %cst_23 = arith.constant 0.000000e+00 : bf16
    %58 = vector.broadcast %cst_23 : bf16 to vector<8x9xbf16>
    %59 = arith.truncf %57 : vector<8x128xf32> to vector<8x128xbf16>
    %60 = tpu.concatenate %58, %59, %58 in 1 : vector<8x9xbf16>, vector<8x128xbf16>, vector<8x9xbf16> -> vector<8x146xbf16>
    %c0_24 = arith.constant 0 : index
    %c0_25 = arith.constant 0 : index
    %61 = vector.load %arg9[%c0_24, %c0_25] : memref<8x24xbf16, #tpu.memory_space<vmem>>, vector<8x24xbf16>
    %62 = vector.extract_strided_slice %60 {offsets = [0, 0], sizes = [8, 128], strides = [1, 1]} : vector<8x146xbf16> to vector<8x128xbf16>
    %63 = vector.extract_strided_slice %60 {offsets = [0, 9], sizes = [8, 128], strides = [1, 1]} : vector<8x146xbf16> to vector<8x128xbf16>
    %64 = vector.extract_strided_slice %60 {offsets = [0, 18], sizes = [8, 128], strides = [1, 1]} : vector<8x146xbf16> to vector<8x128xbf16>
    %65 = tpu.concatenate %62, %63, %64 in 0 : vector<8x128xbf16>, vector<8x128xbf16>, vector<8x128xbf16> -> vector<24x128xbf16>
    %cst_26 = arith.constant dense<0.000000e+00> : vector<8x128xf32>
    %66 = tpu.matmul %61, %65, %cst_26 {dimension_numbers = #tpu.dot_dimension_numbers<[1], [0], [0], [1], [0, 0, 1, 1], [], []>} : vector<8x24xbf16>, vector<24x128xbf16>, vector<8x128xf32> -> vector<8x128xf32>
    %c0_27 = arith.constant 0 : index
    %c0_28 = arith.constant 0 : index
    %67 = vector.load %arg10[%c0_27, %c0_28] : memref<8x1xf32, #tpu.memory_space<vmem>>, vector<8x1xf32>
    %68 = vector.broadcast %67 : vector<8x1xf32> to vector<8x128xf32>
    %69 = arith.addf %66, %68 : vector<8x128xf32>
    %70 = vector.extract_strided_slice %69 {offsets = [0, 13], sizes = [8, 32], strides = [1, 1]} : vector<8x128xf32> to vector<8x32xf32>
    %c0_29 = arith.constant 0 : index
    %c0_30 = arith.constant 0 : index
    %c0_31 = arith.constant 0 : index
    %71 = vector.load %arg11[%c0_29, %c0_30, %c0_31] : memref<1x8x32xf32, #tpu.memory_space<vmem>>, vector<1x8x32xf32>
    %72 = vector.shape_cast %71 : vector<1x8x32xf32> to vector<8x32xf32>
    %73 = vector.shape_cast %70 : vector<8x32xf32> to vector<1x8x32xf32>
    tpu.vector_store %arg11[%c0_29, %c0_30, %c0_31], %73 {strides = array<i32>} : memref<1x8x32xf32, #tpu.memory_space<vmem>>, vector<1x8x32xf32>,
    return
  }
  func.func @transform_0(%arg0: i32, %arg1: i32) -> (i32, i32, i32, i32) {
    %c0_i32 = arith.constant 0 : i32
    %c0_i32_0 = arith.constant 0 : i32
    %c0_i32_1 = arith.constant 0 : i32
    return %arg0, %arg1, %c0_i32, %c0_i32_0 : i32, i32, i32, i32
  }
  func.func @transform_1(%arg0: i32, %arg1: i32) -> (i32, i32) {
    %c0_i32 = arith.constant 0 : i32
    %c0_i32_0 = arith.constant 0 : i32
    %c0_i32_1 = arith.constant 0 : i32
    return %c0_i32, %c0_i32_0 : i32, i32
  }
  func.func @transform_2(%arg0: i32, %arg1: i32) -> (i32, i32) {
    %c0_i32 = arith.constant 0 : i32
    %c0_i32_0 = arith.constant 0 : i32
    %c0_i32_1 = arith.constant 0 : i32
    return %c0_i32, %c0_i32_0 : i32, i32
  }
  func.func @transform_3(%arg0: i32, %arg1: i32) -> (i32, i32) {
    %c0_i32 = arith.constant 0 : i32
    %c0_i32_0 = arith.constant 0 : i32
    %c0_i32_1 = arith.constant 0 : i32
    return %c0_i32, %c0_i32_0 : i32, i32
  }
  func.func @transform_4(%arg0: i32, %arg1: i32) -> (i32, i32) {
    %c0_i32 = arith.constant 0 : i32
    %c0_i32_0 = arith.constant 0 : i32
    %c0_i32_1 = arith.constant 0 : i32
    return %c0_i32, %c0_i32_0 : i32, i32
  }
  func.func @transform_5(%arg0: i32, %arg1: i32) -> (i32, i32) {
    %c0_i32 = arith.constant 0 : i32
    %c0_i32_0 = arith.constant 0 : i32
    %c0_i32_1 = arith.constant 0 : i32
    return %c0_i32, %c0_i32_0 : i32, i32
  }
  func.func @transform_6(%arg0: i32, %arg1: i32) -> (i32, i32) {
    %c0_i32 = arith.constant 0 : i32
    %c0_i32_0 = arith.constant 0 : i32
    %c0_i32_1 = arith.constant 0 : i32
    return %c0_i32, %c0_i32_0 : i32, i32
  }
  func.func @transform_7(%arg0: i32, %arg1: i32) -> (i32, i32) {
    %c0_i32 = arith.constant 0 : i32
    %c0_i32_0 = arith.constant 0 : i32
    %c0_i32_1 = arith.constant 0 : i32
    return %c0_i32, %c0_i32_0 : i32, i32
  }
  func.func @transform_8(%arg0: i32, %arg1: i32) -> (i32, i32) {
    %c0_i32 = arith.constant 0 : i32
    %c0_i32_0 = arith.constant 0 : i32
    %c0_i32_1 = arith.constant 0 : i32
    return %c0_i32, %c0_i32_0 : i32, i32
  }
  func.func @transform_9(%arg0: i32, %arg1: i32) -> (i32, i32, i32) {
    %c0_i32 = arith.constant 0 : i32
    %c0_i32_0 = arith.constant 0 : i32
    return %arg0, %c0_i32, %arg1 : i32, i32, i32
  }
}

</mosaic_0001>

<llo_original>
// kernel: tpu_custom_call.1
$region0: #{tpu_custom_call.1}
  #allocation0 [shape = 'u32[]', space=smem, size = 0x4, offset = 0x4, fixed_abs, tag = 'smem constant byte address 0x4 - core index']
  #allocation1 [shape = 'u32[72,128]{1,0:T(1,128)}', space=vmem, size = 0x9000, scoped, tag = 'internal scratch']
  %s0 = inlined_call_operand.vmem [shape: bf16[2,1,4,256], index: 0, kind: input, shape index: {}]
  %s1 = inlined_call_operand.vmem [shape: bf16[8,16], index: 1, kind: input, shape index: {}]
  %s2 = inlined_call_operand.vmem [shape: f32[8,1], index: 2, kind: input, shape index: {}]
  %s3 = inlined_call_operand.vmem [shape: bf16[8,24], index: 3, kind: input, shape index: {}]
  %s4 = inlined_call_operand.vmem [shape: f32[8,1], index: 4, kind: input, shape index: {}]
  %s5 = inlined_call_operand.vmem [shape: bf16[8,24], index: 5, kind: input, shape index: {}]
  %s6 = inlined_call_operand.vmem [shape: f32[8,1], index: 6, kind: input, shape index: {}]
  %s7 = inlined_call_operand.vmem [shape: bf16[8,24], index: 7, kind: input, shape index: {}]
  %s8 = inlined_call_operand.vmem [shape: f32[8,1], index: 8, kind: input, shape index: {}]
  %s9 = inlined_call_operand.hbm [shape: f32[2,8,32], index: 9, kind: output, shape index: {}]
  %s10 = sld [smem:[#allocation0]]
  $region69: #{tpu_custom_call.1} parent=0
    _
  %s12 = ssub.s32 1, %s10
  %s13 = scalar_select 0, %s12, %s10
  $region1: #{tpu_custom_call.1} parent=0
    #allocation2 [shape = 'u8[8192]{0}', space=vmem, size = 0x2000, scoped, tag = 'output window, operand 0']
    #allocation3 [shape = 's32[2]{0}', space=sflag, size = 0x8, scoped, tag = 'scoped memory for tpu_custom_call.1']
    %14 = vsyncpa [#allocation3], 0
    %s15 = scalar_lea.sflag [#allocation3], 1
    %16 = vsyncpa %s15, 0
    loop: start=0, step=1, limit=4
    $region2: #{tpu_custom_call.1} parent=1 // loop_pre_header
      _
    $region3: #{tpu_custom_call.1} parent=1 // loop_header
      %s18 = sphi 0, %s22
      %p19 = scmp.ge.s32.totalorder %s18, 4
      %s25 = sphi 0, %s37
      %s26 = sphi 0, %s33
      %s27 = sphi 0, %s25
      %s28 = sphi 0, %s26
      %s29 = sphi 0, %s27
      %s30 = sphi 0, %s28
      %s42 = sphi 0, %s44
      %s45 = sphi 0, %s42
      %s46 = sphi 0, %s45
      %s62 = sphi 0, %s46
      %s66 = sphi 0, %s66
      %s68 = sphi 0, %s66
      %s69 = sphi 0, %s68
      %s83 = sphi 0, %s69
      %s87 = sphi 0, %s87
      %s89 = sphi 0, %s87
      %s90 = sphi 0, %s89
      %s104 = sphi 0, %s90
      %s108 = sphi 0, %s108
      %s110 = sphi 0, %s108
      %s111 = sphi 0, %s110
      %s125 = sphi 0, %s111
      %s129 = sphi 0, %s129
      %s131 = sphi 0, %s129
      %s132 = sphi 0, %s131
      %s146 = sphi 0, %s132
      %s150 = sphi 0, %s150
      %s152 = sphi 0, %s150
      %s153 = sphi 0, %s152
      %s167 = sphi 0, %s153
      %s171 = sphi 0, %s171
      %s173 = sphi 0, %s171
      %s174 = sphi 0, %s173
      %s188 = sphi 0, %s174
      %s192 = sphi 0, %s192
      %s194 = sphi 0, %s192
      %s195 = sphi 0, %s194
      %s209 = sphi 0, %s195
      %s213 = sphi 0, %s213
      %s215 = sphi 0, %s213
      %s216 = sphi 0, %s215
      %s230 = sphi 0, %s216
      %s238 = sphi 0, %s240
      %s241 = sphi 0, %s238
      %s242 = sphi 0, %s241
      %s258 = sphi 0, %s242
    $region4: #{tpu_custom_call.1} parent=1 // loop_header_branch
      %21 = sbr.rel (%p19) target = $region8
    $region5: #{tpu_custom_call.1} parent=1 // loop_body
      %s23 = ssub.s32 %s18, 1
      %s24 = ssub.s32 %s18, 2
      %s31 = sadd.s32 1, %s26
      %p32 = scmp.ge.s32.totalorder %s31, 1
      %s33 = scalar_select %p32, 0, %s31
      %s34 = sadd.s32 1, %s25
      %s35 = scalar_select %p32, %s34, %s25
      %p36 = scmp.ge.s32.totalorder %s35, 2
      %s37 = scalar_select %p36, 0, %s35
      %s38 = ssub.s32 %s25, %s37
      %s39 = ssub.s32 %s26, %s33
      %s40 = sor.u32 %s38, %s39
      %p41 = scmp.eq.s32.totalorder %s40, 0
      %s43 = sadd.s32 %s42, 1
      %s44 = scalar_select %p41, %s42, %s43
      %p47 = pneg %p41
      %p48 = scmp.eq.s32.totalorder %s18, 1
      %p49 = por %p47, %p48
      %p50 = scmp.ne.s32.totalorder %s42, %s45
      %p51 = scmp.eq.s32.totalorder %s18, 0
      %p52 = por %p50, %p51
      %p53 = scmp.ne.s32.totalorder %s42, %s45
      %p54 = scmp.eq.s32.totalorder %s23, 1
      %p55 = por %p53, %p54
      %p56 = scmp.ne.s32.totalorder %s45, %s46
      %p57 = scmp.eq.s32.totalorder %s23, 0
      %p58 = por %p56, %p57
      %p59 = scmp.ne.s32.totalorder %s45, %s46
      %p60 = scmp.eq.s32.totalorder %s24, 1
      %p61 = por %p59, %p60
      %p63 = scmp.ne.s32.totalorder %s46, %s62
      %p64 = scmp.eq.s32.totalorder %s24, 0
      %p65 = por %p63, %p64
      %s67 = sadd.s32 %s66, 1
      %p70 = scmp.eq.s32.totalorder %s18, 1
      %p71 = scmp.ne.s32.totalorder %s66, %s68
      %p72 = scmp.eq.s32.totalorder %s18, 0
      %p73 = por %p71, %p72
      %p74 = scmp.ne.s32.totalorder %s66, %s68
      %p75 = scmp.eq.s32.totalorder %s23, 1
      %p76 = por %p74, %p75
      %p77 = scmp.ne.s32.totalorder %s68, %s69
      %p78 = scmp.eq.s32.totalorder %s23, 0
      %p79 = por %p77, %p78
      %p80 = scmp.ne.s32.totalorder %s68, %s69
      %p81 = scmp.eq.s32.totalorder %s24, 1
      %p82 = por %p80, %p81
      %p84 = scmp.ne.s32.totalorder %s69, %s83
      %p85 = scmp.eq.s32.totalorder %s24, 0
      %p86 = por %p84, %p85
      %s88 = sadd.s32 %s87, 1
      %p91 = scmp.eq.s32.totalorder %s18, 1
      %p92 = scmp.ne.s32.totalorder %s87, %s89
      %p93 = scmp.eq.s32.totalorder %s18, 0
      %p94 = por %p92, %p93
      %p95 = scmp.ne.s32.totalorder %s87, %s89
      %p96 = scmp.eq.s32.totalorder %s23, 1
      %p97 = por %p95, %p96
      %p98 = scmp.ne.s32.totalorder %s89, %s90
      %p99 = scmp.eq.s32.totalorder %s23, 0
      %p100 = por %p98, %p99
      %p101 = scmp.ne.s32.totalorder %s89, %s90
      %p102 = scmp.eq.s32.totalorder %s24, 1
      %p103 = por %p101, %p102
      %p105 = scmp.ne.s32.totalorder %s90, %s104
      %p106 = scmp.eq.s32.totalorder %s24, 0
      %p107 = por %p105, %p106
      %s109 = sadd.s32 %s108, 1
      %p112 = scmp.eq.s32.totalorder %s18, 1
      %p113 = scmp.ne.s32.totalorder %s108, %s110
      %p114 = scmp.eq.s32.totalorder %s18, 0
      %p115 = por %p113, %p114
      %p116 = scmp.ne.s32.totalorder %s108, %s110
      %p117 = scmp.eq.s32.totalorder %s23, 1
      %p118 = por %p116, %p117
      %p119 = scmp.ne.s32.totalorder %s110, %s111
      %p120 = scmp.eq.s32.totalorder %s23, 0
      %p121 = por %p119, %p120
      %p122 = scmp.ne.s32.totalorder %s110, %s111
      %p123 = scmp.eq.s32.totalorder %s24, 1
      %p124 = por %p122, %p123
      %p126 = scmp.ne.s32.totalorder %s111, %s125
      %p127 = scmp.eq.s32.totalorder %s24, 0
      %p128 = por %p126, %p127
      %s130 = sadd.s32 %s129, 1
      %p133 = scmp.eq.s32.totalorder %s18, 1
      %p134 = scmp.ne.s32.totalorder %s129, %s131
      %p135 = scmp.eq.s32.totalorder %s18, 0
      %p136 = por %p134, %p135
      %p137 = scmp.ne.s32.totalorder %s129, %s131
      %p138 = scmp.eq.s32.totalorder %s23, 1
      %p139 = por %p137, %p138
      %p140 = scmp.ne.s32.totalorder %s131, %s132
      %p141 = scmp.eq.s32.totalorder %s23, 0
      %p142 = por %p140, %p141
      %p143 = scmp.ne.s32.totalorder %s131, %s132
      %p144 = scmp.eq.s32.totalorder %s24, 1
      %p145 = por %p143, %p144
      %p147 = scmp.ne.s32.totalorder %s132, %s146
      %p148 = scmp.eq.s32.totalorder %s24, 0
      %p149 = por %p147, %p148
      %s151 = sadd.s32 %s150, 1
      %p154 = scmp.eq.s32.totalorder %s18, 1
      %p155 = scmp.ne.s32.totalorder %s150, %s152
      %p156 = scmp.eq.s32.totalorder %s18, 0
      %p157 = por %p155, %p156
      %p158 = scmp.ne.s32.totalorder %s150, %s152
      %p159 = scmp.eq.s32.totalorder %s23, 1
      %p160 = por %p158, %p159
      %p161 = scmp.ne.s32.totalorder %s152, %s153
      %p162 = scmp.eq.s32.totalorder %s23, 0
      %p163 = por %p161, %p162
      %p164 = scmp.ne.s32.totalorder %s152, %s153
      %p165 = scmp.eq.s32.totalorder %s24, 1
      %p166 = por %p164, %p165
      %p168 = scmp.ne.s32.totalorder %s153, %s167
      %p169 = scmp.eq.s32.totalorder %s24, 0
      %p170 = por %p168, %p169
      %s172 = sadd.s32 %s171, 1
      %p175 = scmp.eq.s32.totalorder %s18, 1
      %p176 = scmp.ne.s32.totalorder %s171, %s173
      %p177 = scmp.eq.s32.totalorder %s18, 0
      %p178 = por %p176, %p177
      %p179 = scmp.ne.s32.totalorder %s171, %s173
      %p180 = scmp.eq.s32.totalorder %s23, 1
      %p181 = por %p179, %p180
      %p182 = scmp.ne.s32.totalorder %s173, %s174
      %p183 = scmp.eq.s32.totalorder %s23, 0
      %p184 = por %p182, %p183
      %p185 = scmp.ne.s32.totalorder %s173, %s174
      %p186 = scmp.eq.s32.totalorder %s24, 1
      %p187 = por %p185, %p186
      %p189 = scmp.ne.s32.totalorder %s174, %s188
      %p190 = scmp.eq.s32.totalorder %s24, 0
      %p191 = por %p189, %p190
      %s193 = sadd.s32 %s192, 1
      %p196 = scmp.eq.s32.totalorder %s18, 1
      %p197 = scmp.ne.s32.totalorder %s192, %s194
      %p198 = scmp.eq.s32.totalorder %s18, 0
      %p199 = por %p197, %p198
      %p200 = scmp.ne.s32.totalorder %s192, %s194
      %p201 = scmp.eq.s32.totalorder %s23, 1
      %p202 = por %p200, %p201
      %p203 = scmp.ne.s32.totalorder %s194, %s195
      %p204 = scmp.eq.s32.totalorder %s23, 0
      %p205 = por %p203, %p204
      %p206 = scmp.ne.s32.totalorder %s194, %s195
      %p207 = scmp.eq.s32.totalorder %s24, 1
      %p208 = por %p206, %p207
      %p210 = scmp.ne.s32.totalorder %s195, %s209
      %p211 = scmp.eq.s32.totalorder %s24, 0
      %p212 = por %p210, %p211
      %s214 = sadd.s32 %s213, 1
      %p217 = scmp.eq.s32.totalorder %s18, 1
      %p218 = scmp.ne.s32.totalorder %s213, %s215
      %p219 = scmp.eq.s32.totalorder %s18, 0
      %p220 = por %p218, %p219
      %p221 = scmp.ne.s32.totalorder %s213, %s215
      %p222 = scmp.eq.s32.totalorder %s23, 1
      %p223 = por %p221, %p222
      %p224 = scmp.ne.s32.totalorder %s215, %s216
      %p225 = scmp.eq.s32.totalorder %s23, 0
      %p226 = por %p224, %p225
      %p227 = scmp.ne.s32.totalorder %s215, %s216
      %p228 = scmp.eq.s32.totalorder %s24, 1
      %p229 = por %p227, %p228
      %p231 = scmp.ne.s32.totalorder %s216, %s230
      %p232 = scmp.eq.s32.totalorder %s24, 0
      %p233 = por %p231, %p232
      %s234 = ssub.s32 %s25, %s37
      %s235 = ssub.s32 %s26, %s33
      %s236 = sor.u32 %s234, %s235
      %p237 = scmp.eq.s32.totalorder %s236, 0
      %s239 = sadd.s32 %s238, 1
      %s240 = scalar_select %p237, %s238, %s239
      %p243 = pneg %p237
      %p244 = scmp.eq.s32.totalorder %s18, 1
      %p245 = por %p243, %p244
      %p246 = scmp.ne.s32.totalorder %s238, %s241
      %p247 = scmp.eq.s32.totalorder %s18, 0
      %p248 = por %p246, %p247
      %p249 = scmp.ne.s32.totalorder %s238, %s241
      %p250 = scmp.eq.s32.totalorder %s23, 1
      %p251 = por %p249, %p250
      %p252 = scmp.ne.s32.totalorder %s241, %s242
      %p253 = scmp.eq.s32.totalorder %s23, 0
      %p254 = por %p252, %p253
      %p255 = scmp.ne.s32.totalorder %s241, %s242
      %p256 = scmp.eq.s32.totalorder %s24, 1
      %p257 = por %p255, %p256
      %p259 = scmp.ne.s32.totalorder %s242, %s258
      %p260 = scmp.eq.s32.totalorder %s24, 0
      %p261 = por %p259, %p260
      %p262 = scmp.le.s32.totalorder 1, %s18
      %p263 = scmp.lt.s32.totalorder %s18, 3
      %p264 = pnand %p262, %p263
      %p265 = pneg %p264
      // Predicated region
      $region9: #{tpu_custom_call.1} parent=5 // pred_check
        _
      $region10: #{tpu_custom_call.1} parent=5 // pred_check_branch
        %267 = sbr.rel (%p264) target = $region12
      $region11: #{tpu_custom_call.1} parent=5 // pred_region
        %s268 = ssub.s32 %s18, 1
        // Predicated region
        $region13: #{tpu_custom_call.1} parent=11 // pred_check
          %p269 = pneg %p79
        $region14: #{tpu_custom_call.1} parent=11 // pred_check_branch
          %271 = sbr.rel (%p269) target = $region16
        $region15: #{tpu_custom_call.1} parent=11 // pred_region
          _
        $region16: #{tpu_custom_call.1} parent=11 // pred_fallthru
          _
        // Predicated region
        $region17: #{tpu_custom_call.1} parent=11 // pred_check
          %p272 = pneg %p100
        $region18: #{tpu_custom_call.1} parent=11 // pred_check_branch
          %274 = sbr.rel (%p272) target = $region20
        $region19: #{tpu_custom_call.1} parent=11 // pred_region
          _
        $region20: #{tpu_custom_call.1} parent=11 // pred_fallthru
          _
        // Predicated region
        $region21: #{tpu_custom_call.1} parent=11 // pred_check
          %p275 = pneg %p121
        $region22: #{tpu_custom_call.1} parent=11 // pred_check_branch
          %277 = sbr.rel (%p275) target = $region24
        $region23: #{tpu_custom_call.1} parent=11 // pred_region
          _
        $region24: #{tpu_custom_call.1} parent=11 // pred_fallthru
          _
        // Predicated region
        $region25: #{tpu_custom_call.1} parent=11 // pred_check
          %p278 = pneg %p142
        $region26: #{tpu_custom_call.1} parent=11 // pred_check_branch
          %280 = sbr.rel (%p278) target = $region28
        $region27: #{tpu_custom_call.1} parent=11 // pred_region
          _
        $region28: #{tpu_custom_call.1} parent=11 // pred_fallthru
          _
        // Predicated region
        $region29: #{tpu_custom_call.1} parent=11 // pred_check
          %p281 = pneg %p163
        $region30: #{tpu_custom_call.1} parent=11 // pred_check_branch
          %283 = sbr.rel (%p281) target = $region32
        $region31: #{tpu_custom_call.1} parent=11 // pred_region
          _
        $region32: #{tpu_custom_call.1} parent=11 // pred_fallthru
          _
        // Predicated region
        $region33: #{tpu_custom_call.1} parent=11 // pred_check
          %p284 = pneg %p184
        $region34: #{tpu_custom_call.1} parent=11 // pred_check_branch
          %286 = sbr.rel (%p284) target = $region36
        $region35: #{tpu_custom_call.1} parent=11 // pred_region
          _
        $region36: #{tpu_custom_call.1} parent=11 // pred_fallthru
          _
        // Predicated region
        $region37: #{tpu_custom_call.1} parent=11 // pred_check
          %p287 = pneg %p205
        $region38: #{tpu_custom_call.1} parent=11 // pred_check_branch
          %289 = sbr.rel (%p287) target = $region40
        $region39: #{tpu_custom_call.1} parent=11 // pred_region
          _
        $region40: #{tpu_custom_call.1} parent=11 // pred_fallthru
          _
        // Predicated region
        $region41: #{tpu_custom_call.1} parent=11 // pred_check
          %p290 = pneg %p226
        $region42: #{tpu_custom_call.1} parent=11 // pred_check_branch
          %292 = sbr.rel (%p290) target = $region44
        $region43: #{tpu_custom_call.1} parent=11 // pred_region
          _
        $region44: #{tpu_custom_call.1} parent=11 // pred_fallthru
          _
      $region12: #{tpu_custom_call.1} parent=5 // pred_fallthru
        _
      %p293 = scmp.lt.s32.totalorder %s18, 2
      // Predicated region
      $region45: #{tpu_custom_call.1} parent=5 // pred_check
        %p294 = pneg %p293
      $region46: #{tpu_custom_call.1} parent=5 // pred_check_branch
        %296 = sbr.rel (%p294) target = $region48
      $region47: #{tpu_custom_call.1} parent=5 // pred_region
        // Predicated region
        $region49: #{tpu_custom_call.1} parent=47 // pred_check
          %p297 = pneg %p52
        $region50: #{tpu_custom_call.1} parent=47 // pred_check_branch
          %299 = sbr.rel (%p297) target = $region52
        $region51: #{tpu_custom_call.1} parent=47 // pred_region
          %p300 = scmp.lt.s32.totalorder %s25, 1
          %s301 = scalar_select %p300, %s25, 1
          %p302 = scmp.lt.s32.totalorder %s26, 0
          %s303 = scalar_select %p302, %s26, 0
          %s304 = smul.addr %s303, 2
          %s305 = smul.addr %s301, 2
          %s306 = sadd.s32 %s304, %s305
          %s307 = smul.addr %s306, 2
          %s308 = scalar_lea.vmem %s0, %s307
        $region52: #{tpu_custom_call.1} parent=47 // pred_fallthru
          _
      $region48: #{tpu_custom_call.1} parent=5 // pred_fallthru
        _
      %p309 = scmp.le.s32.totalorder 1, %s18
      %p310 = scmp.lt.s32.totalorder %s18, 3
      %p311 = pnand %p309, %p310
      %p312 = pneg %p311
      // Predicated region
      $region53: #{tpu_custom_call.1} parent=5 // pred_check
        _
      $region54: #{tpu_custom_call.1} parent=5 // pred_check_branch
        %314 = sbr.rel (%p311) target = $region56
      $region55: #{tpu_custom_call.1} parent=5 // pred_region
        %s315 = ssub.s32 %s18, 1
        %p316 = scmp.lt.s32.totalorder %s27, 1
        %s317 = scalar_select %p316, %s27, 1
        %p318 = scmp.lt.s32.totalorder %s28, 0
        %s319 = scalar_select %p318, %s28, 0
        %s320 = smul.addr %s319, 2
        %s321 = smul.addr %s317, 2
        %s322 = sadd.s32 %s320, %s321
        %s323 = smul.addr %s322, 2
        %s324 = scalar_lea.vmem %s0, %s323
        %p325 = pneg %p58
        %p326 = pneg %p55
        %p327 = pneg %p79
        %p328 = pneg %p76
        %p329 = pneg %p100
        %p330 = pneg %p97
        %p331 = pneg %p121
        %p332 = pneg %p118
        %p333 = pneg %p142
        %p334 = pneg %p139
        %p335 = pneg %p163
        %p336 = pneg %p160
        %p337 = pneg %p184
        %p338 = pneg %p181
        %p339 = pneg %p205
        %p340 = pneg %p202
        %p341 = pneg %p226
        %p342 = pneg %p223
        %p343 = pneg %p254
        %p344 = pneg %p251
        %s345 = sand.u32 %s241, 1
        %s346 = scalar_lea.sflag [#allocation3], %s345
        %s347 = sand.u32 %s241, 1
        %s348 = smul.addr %s347, 8
        %s349 = scalar_lea.vmem [#allocation2], %s348
        %p350 = scmp.lt.s32.totalorder %s27, 1
        %s351 = scalar_select %p350, %s27, 1
        %p352 = scmp.lt.s32.totalorder %s28, 0
        %s353 = scalar_select %p352, %s28, 0
        %s354 = smul.addr %s353, 2
        %s355 = smul.addr %s351, 2
        %s356 = sadd.s32 %s354, %s355
        %s357 = smul.addr %s356, 2
        %s358 = scalar_lea.vmem %s0, %s357
        %v360 = vld [vmem:[%s358] sm:$0xf]
        %s361 = smul.u32 %s28, 32
        %s362 = ssub.s32 %s361, 13
        %v363 = vlaneseq
        %v364 = vand.u32 %v363, 127
        %v365 = vstv %s362
        %v366 = vadd.s32 %v365, %v364
        %vm367 = vcmp.ge.s32.totalorder %v366, 0
        %vm368 = vcmp.lt.s32.totalorder %v366, 32
        %vm369 = vmand %vm367, %vm368
        %v370 = vld [vmem:[%s1] sm:$0xf]
        %s372 = scalar_lea.vmem [#allocation1], 1
        %373 = vst [vmem:[%s372] ss:$4 sm:$0xff] %v360
        %v374 = vld.sshfl [vmem:[#allocation1] sm:$0xff pattern:$0x73625140]
        %v376 = vld.sshfl [vmem:[#allocation1 + $0x8] sm:$0xff pattern:$0x73625140]
        %378 = vrot.lane.b32.xlu0 %v374, 127
        %v379 = vpop.permute.xlu0 %378
        %380 = vrot.lane.b32.xlu0 %v376, 127
        %v381 = vpop.permute.xlu0 %380
        %vm382 = vcmask 1039360
        %v383 = vsel %vm382, %v379, %v381
        %s384 = scalar_lea.vmem [#allocation1], 2
        %385 = vst [vmem:[%s384] ss:$4 sm:$0xff] %v360
        %v386 = vld.sshfl [vmem:[#allocation1] sm:$0xff pattern:$0x73625140]
        %v388 = vld.sshfl [vmem:[#allocation1 + $0x8] sm:$0xff pattern:$0x73625140]
        %390 = vrot.lane.b32.xlu0 %v386, 126
        %v391 = vpop.permute.xlu0 %390
        %392 = vrot.lane.b32.xlu0 %v388, 126
        %v393 = vpop.permute.xlu0 %392
        %vm394 = vcmask 1031168
        %v395 = vsel %vm394, %v391, %v393
        %s396 = scalar_lea.vmem [#allocation1], 3
        %397 = vst [vmem:[%s396] ss:$4 sm:$0xff] %v360
        %v398 = vld.sshfl [vmem:[#allocation1] sm:$0xff pattern:$0x73625140]
        %v400 = vld.sshfl [vmem:[#allocation1 + $0x8] sm:$0xff pattern:$0x73625140]
        %402 = vrot.lane.b32.xlu0 %v398, 125
        %v403 = vpop.permute.xlu0 %402
        %404 = vrot.lane.b32.xlu0 %v400, 125
        %v405 = vpop.permute.xlu0 %404
        %vm406 = vcmask 1022976
        %v407 = vsel %vm406, %v403, %v405
        %vm408 = vcmask 1041408
        %v410 = vsel %vm408, %v360, %v383
        %vm411 = vcmask 1043456
        %v413 = vsel %vm411, %v410, %v395
        %vm414 = vcmask 1045504
        %v416 = vsel %vm414, %v413, %v407
        %v418 = vld [vmem:[%s2] sm:$0xff]
        %420 = vset.pattern.permute.xlu0 0
        %421 = vperm.xlu0 %420, %v418
        %v422 = vpop.permute.xlu0 %421
        %vm424 = vcmask 130048
        %v426 = vsel %vm424, %v370, 0
        %428 = vmatpush.bf16.msra.mxu0 0
        %429 = vmatpush.bf16.msra.mxu0 0
        %430 = vmatpush.bf16.msra.mxu0 0
        %431 = vmatpush.bf16.msra.mxu0 0
        %432 = vmatpush.bf16.msra.mxu0 0
        %433 = vmatpush.bf16.msra.mxu0 0
        %434 = vmatpush.bf16.msra.mxu0 0
        %435 = vmatpush.bf16.msra.mxu0 %v416
        %436 = vmatmul.bf16.gmra.mxu0 %v426
        %v437 = vpop.f32.mrf.mxu0
        %v438 = vadd.f32 %v422, %v437
        %v439 = vpop.f32.mrf.mxu0
        %440 = vdwg.mxu0
        %v441 = vsel %vm369, 1, 0
        %vm442 = vcmp.eq.s32.totalorder %v441, 1
        %v443 = vsel %vm442, %v438, 0.0
        %v444 = vpack.c.bf16 %v443, %v443
        %v446 = vunpack.c.l.b16 %v444
        %v447 = vpack.c.b16 %v446, %v446
        %448 = vrot.lane.b32.xlu0 %v447, 1
        %v449 = vpop.permute.xlu0 %448
        %vm450 = vcmask 7168
        %v453 = vsel %vm450, 0, %v449
        %v454 = vsel %vm450, %v449, 0
        %v455 = vld [vmem:[%s3] sm:$0xf]
        %v458 = vrot.slane %v453, 4
        %v459 = vrot.slane %v454, 4
        %460 = vrot.lane.b32.xlu0 %v458, 127
        %v461 = vpop.permute.xlu0 %460
        %462 = vrot.lane.b32.xlu0 %v459, 127
        %v463 = vpop.permute.xlu0 %462
        %v464 = vsel %vm382, %v461, %v463
        %465 = vrot.lane.b32.xlu0 %v453, 126
        %v466 = vpop.permute.xlu0 %465
        %467 = vrot.lane.b32.xlu0 %v454, 126
        %v468 = vpop.permute.xlu0 %467
        %v469 = vsel %vm394, %v466, %v468
        %v471 = vsel %vm411, %v453, %v464
        %v473 = vld [vmem:[%s4] sm:$0xff]
        %475 = vset.pattern.permute.xlu0 0
        %476 = vperm.xlu0 %475, %v473
        %v477 = vpop.permute.xlu0 %476
        %vm479 = vcmask 195584
        %v481 = vsel %vm479, %v455, 0
        %v484 = vsel %vm411, %v469, 0
        %486 = vmatpush.bf16.msra.mxu0 0
        %487 = vmatpush.bf16.msra.mxu0 0
        %488 = vmatpush.bf16.msra.mxu0 0
        %489 = vmatpush.bf16.msra.mxu0 0
        %490 = vmatpush.bf16.msra.mxu0 0
        %491 = vmatpush.bf16.msra.mxu0 0
        %492 = vmatpush.bf16.msra.mxu0 %v484
        %493 = vmatpush.bf16.msra.mxu0 %v471
        %494 = vmatmul.bf16.gmra.mxu0 %v481
        %v495 = vpop.f32.mrf.mxu0
        %v496 = vadd.f32 %v477, %v495
        %v497 = vpop.f32.mrf.mxu0
        %498 = vdwg.mxu0
        %v499 = vsel %vm442, %v496, 0.0
        %v500 = vpack.c.bf16 %v499, %v499
        %v502 = vunpack.c.l.b16 %v500
        %v503 = vpack.c.b16 %v502, %v502
        %504 = vrot.lane.b32.xlu0 %v503, 3
        %v505 = vpop.permute.xlu0 %504
        %vm506 = vcmask 23552
        %v508 = vsel %vm506, 0, %v505
        %v509 = vsel %vm506, %v505, 0
        %v510 = vld [vmem:[%s5] sm:$0xf]
        %v513 = vrot.slane %v508, 4
        %v514 = vrot.slane %v509, 4
        %515 = vrot.lane.b32.xlu0 %v513, 125
        %v516 = vpop.permute.xlu0 %515
        %517 = vrot.lane.b32.xlu0 %v514, 125
        %v518 = vpop.permute.xlu0 %517
        %v519 = vsel %vm406, %v516, %v518
        %520 = vrot.lane.b32.xlu0 %v508, 122
        %v521 = vpop.permute.xlu0 %520
        %522 = vrot.lane.b32.xlu0 %v509, 122
        %v523 = vpop.permute.xlu0 %522
        %vm524 = vcmask 998400
        %v525 = vsel %vm524, %v521, %v523
        %v527 = vsel %vm411, %v508, %v519
        %v529 = vld [vmem:[%s6] sm:$0xff]
        %531 = vset.pattern.permute.xlu0 0
        %532 = vperm.xlu0 %531, %v529
        %v533 = vpop.permute.xlu0 %532
        %v536 = vsel %vm479, %v510, 0
        %v539 = vsel %vm411, %v525, 0
        %541 = vmatpush.bf16.msra.mxu0 0
        %542 = vmatpush.bf16.msra.mxu0 0
        %543 = vmatpush.bf16.msra.mxu0 0
        %544 = vmatpush.bf16.msra.mxu0 0
        %545 = vmatpush.bf16.msra.mxu0 0
        %546 = vmatpush.bf16.msra.mxu0 0
        %547 = vmatpush.bf16.msra.mxu0 %v539
        %548 = vmatpush.bf16.msra.mxu0 %v527
        %549 = vmatmul.bf16.gmra.mxu0 %v536
        %v550 = vpop.f32.mrf.mxu0
        %v551 = vadd.f32 %v533, %v550
        %v552 = vpop.f32.mrf.mxu0
        %553 = vdwg.mxu0
        %v554 = vsel %vm442, %v551, 0.0
        %v555 = vpack.c.bf16 %v554, %v554
        %v557 = vunpack.c.l.b16 %v555
        %v558 = vpack.c.b16 %v557, %v557
        %559 = vrot.lane.b32.xlu0 %v558, 9
        %v560 = vpop.permute.xlu0 %559
        %vm561 = vcmask 72704
        %v563 = vsel %vm561, 0, %v560
        %v564 = vsel %vm561, %v560, 0
        %v565 = vld [vmem:[%s7] sm:$0xf]
        %v568 = vrot.slane %v563, 4
        %v569 = vrot.slane %v564, 4
        %570 = vrot.lane.b32.xlu0 %v568, 119
        %v571 = vpop.permute.xlu0 %570
        %572 = vrot.lane.b32.xlu0 %v569, 119
        %v573 = vpop.permute.xlu0 %572
        %vm574 = vcmask 973824
        %v575 = vsel %vm574, %v571, %v573
        %576 = vrot.lane.b32.xlu0 %v563, 110
        %v577 = vpop.permute.xlu0 %576
        %578 = vrot.lane.b32.xlu0 %v564, 110
        %v579 = vpop.permute.xlu0 %578
        %vm580 = vcmask 900096
        %v581 = vsel %vm580, %v577, %v579
        %v583 = vsel %vm411, %v563, %v575
        %v585 = vld [vmem:[%s8] sm:$0xff]
        %587 = vset.pattern.permute.xlu0 0
        %588 = vperm.xlu0 %587, %v585
        %v589 = vpop.permute.xlu0 %588
        %v592 = vsel %vm479, %v565, 0
        %v595 = vsel %vm411, %v581, 0
        %597 = vmatpush.bf16.msra.mxu0 0
        %598 = vmatpush.bf16.msra.mxu0 0
        %599 = vmatpush.bf16.msra.mxu0 0
        %600 = vmatpush.bf16.msra.mxu0 0
        %601 = vmatpush.bf16.msra.mxu0 0
        %602 = vmatpush.bf16.msra.mxu0 0
        %603 = vmatpush.bf16.msra.mxu0 %v595
        %604 = vmatpush.bf16.msra.mxu0 %v583
        %605 = vmatmul.bf16.gmra.mxu0 %v592
        %v606 = vpop.f32.mrf.mxu0
        %v607 = vadd.f32 %v589, %v606
        %v608 = vpop.f32.mrf.mxu0
        %609 = vdwg.mxu0
        %611 = vrot.lane.b32.xlu0 %v607, 115
        %v612 = vpop.permute.xlu0 %611
        %vm614 = vcmask 261120
        %615 = vst.msk [vmem:[%s349] sm:$0xff] %vm614, %v612
        %s616 = sand.u32 %s241, 1
        %s617 = scalar_lea.sflag [#allocation3], %s616
        %s618 = sand.u32 %s241, 1
        %s619 = smul.addr %s618, 8
        %s620 = scalar_lea.vmem [#allocation2], %s619
        // Predicated region
        $region57: #{tpu_custom_call.1} parent=55 // pred_check
          %p621 = pneg %p251
        $region58: #{tpu_custom_call.1} parent=55 // pred_check_branch
          %623 = sbr.rel (%p621) target = $region60
        $region59: #{tpu_custom_call.1} parent=55 // pred_region
          %625 = vsyncadd %s617, 0
          %s626 = sadd.s32 %s28, %s27
          %s627 = smul.addr %s626, 8
          %s628 = scalar_lea.hbm %s9, %s627
          %s630 = sshll.u32 %s620, 4
          %s631 = int_to_ptr.vmem [resolvable:$true] %s630
          %s632 = sshll.u32 %s628, 4
          %s633 = int_to_ptr.hbm [resolvable:$true] %s632
          %635 = dma.vmem_to_hbm [thread:$0]  %s631, 128, %s633, %s617
        $region60: #{tpu_custom_call.1} parent=55 // pred_fallthru
          _
      $region56: #{tpu_custom_call.1} parent=5 // pred_fallthru
        _
      %p636 = scmp.le.s32.totalorder 2, %s18
      // Predicated region
      $region61: #{tpu_custom_call.1} parent=5 // pred_check
        %p637 = pneg %p636
      $region62: #{tpu_custom_call.1} parent=5 // pred_check_branch
        %639 = sbr.rel (%p637) target = $region64
      $region63: #{tpu_custom_call.1} parent=5 // pred_region
        %s640 = ssub.s32 %s18, 2
        // Predicated region
        $region65: #{tpu_custom_call.1} parent=63 // pred_check
          %p641 = pneg %p257
        $region66: #{tpu_custom_call.1} parent=63 // pred_check_branch
          %643 = sbr.rel (%p641) target = $region68
        $region67: #{tpu_custom_call.1} parent=63 // pred_region
          %s644 = sand.u32 %s242, 1
          %s645 = scalar_lea.sflag [#allocation3], %s644
          %s646 = sand.u32 %s242, 1
          %s647 = smul.addr %s646, 8
          %s648 = scalar_lea.vmem [#allocation2], %s647
          %650 = dma.done %s645, 128
        $region68: #{tpu_custom_call.1} parent=63 // pred_fallthru
          _
      $region64: #{tpu_custom_call.1} parent=5 // pred_fallthru
        _
    $region6: #{tpu_custom_call.1} parent=1 // loop_footer
      %s22 = sadd.s32 1, %s18
    $region7: #{tpu_custom_call.1} parent=1 // loop_footer_branch
      %17 = sbr.rel target = $region3
    $region8: #{tpu_custom_call.1} parent=1 // loop_exit
      _
    %651 = vsyncpa [#allocation3], 1
    %s652 = scalar_lea.sflag [#allocation3], 1
    %653 = vsyncpa %s652, 1

</llo_original>
